<compile_context>
chip_gen: v6e
topology: v6e:2x2x1
jax: 0.10.0
libtpu: 0.0.40
codegen_flags: <defaults>
</compile_context>

<pallas_src>
import functools

import jax
import jax.numpy as jnp
from jax import lax
from jax.experimental import pallas as pl
from jax.experimental.pallas import tpu as pltpu


def _round_up(x, m):
    return ((x + m - 1) // m) * m


def _ann_fused_kernel(*refs, n_layers):
    """One M-tile of the whole ANN stack, weights VMEM-resident."""
    if n_layers > 1:
        x_ref, w0_ref, b0_ref, w1_ref, b1_ref, o_ref = refs
    else:
        x_ref, w0_ref, b0_ref, o_ref = refs

    # x[M, K] · w[N, K]^T  ->  [M, N]   (PyTorch weight layout, no transpose op)
    dn = (((1,), (1,)), ((), ()))

    h = lax.dot_general(
        x_ref[...], w0_ref[...], dn, preferred_element_type=jnp.float32
    )
    h = h + b0_ref[...]  # biases are f32 (1, N) rows

    if n_layers > 1:
        w1 = w1_ref[...]
        b1 = b1_ref[...]
        # n_layers is static -> unrolled; relu fused into the matmul input.
        for _ in range(n_layers - 1):
            a = jnp.maximum(h, 0.0).astype(w1.dtype)
            h = lax.dot_general(
                a, w1, dn, preferred_element_type=jnp.float32
            ) + b1

    o_ref[...] = h.astype(o_ref.dtype)


@functools.partial(jax.jit, static_argnames=("n_ANNlayers", "compute_dtype"))
def ann_forward(x, w0, b0, w1, b1, *, n_ANNlayers=1, compute_dtype=None):
    """Pallas equivalent of ANN.forward (dropout = identity / eval mode).

    x: (..., input_size); w0: (reduced, input_size); b0: (reduced,);
    w1: (reduced, reduced); b1: (reduced,).
    compute_dtype: optional MXU input dtype (e.g. jnp.bfloat16); accumulation
    and bias add stay f32, output keeps x.dtype.
    """
    out_dtype = x.dtype
    leading = x.shape[:-1]
    x2 = x.reshape(-1, x.shape[-1])

    if compute_dtype is not None:
        x2 = x2.astype(compute_dtype)
        w0 = w0.astype(compute_dtype)
        w1 = w1.astype(compute_dtype)

    b0_2d = b0.reshape(1, -1).astype(jnp.float32)
    b1_2d = b1.reshape(1, -1).astype(jnp.float32)

    M, K = x2.shape
    N0 = w0.shape[0]
    N1 = w1.shape[0]
    n_out = N0 if n_ANNlayers <= 1 else N1

    # dtype-aware sublane alignment for the M (row) tile: 8 for 32-bit,
    # 16 for 16-bit, 32 for 8-bit packed dtypes.
    itemsize = jnp.dtype(x2.dtype).itemsize
    align = max(8, 32 // itemsize)
    tm = min(256, _round_up(M, align))      # <=256 -> >=2 M tiles once M>=512
    Mp = _round_up(M, tm)                   # tm always divides Mp
    if Mp != M:
        # single pad for the whole fused stack (< tm rows), sliced off at end
        x2 = jnp.pad(x2, ((0, Mp - M), (0, 0)))

    grid = (Mp // tm,)
    kernel = functools.partial(_ann_fused_kernel, n_layers=n_ANNlayers)

    # Full-extent weight/bias blocks with constant index maps -> DMA'd once,
    # resident in VMEM across all M tiles.  (w0 512KB + w1 256KB f32 << VMEM.)
    in_specs = [
        pl.BlockSpec((tm, K), lambda i: (i, 0)),
        pl.BlockSpec((N0, K), lambda i: (0, 0)),
        pl.BlockSpec((1, N0), lambda i: (0, 0)),
    ]
    args = [x2, w0, b0_2d]
    if n_ANNlayers > 1:
        in_specs += [
            pl.BlockSpec((N1, N0), lambda i: (0, 0)),
            pl.BlockSpec((1, N1), lambda i: (0, 0)),
        ]
        args += [w1, b1_2d]

    out = pl.pallas_call(
        kernel,
        out_shape=jax.ShapeDtypeStruct((Mp, n_out), out_dtype),
        grid_spec=pltpu.PrefetchScalarGridSpec(
            num_scalar_prefetch=0,
            grid=grid,
            in_specs=in_specs,
            out_specs=pl.BlockSpec((tm, n_out), lambda i: (i, 0)),
        ),
        compiler_params=pltpu.CompilerParams(
            dimension_semantics=("parallel",),
        ),
    )(*args)

    # TODO(synk): nn.Dropout is treated as identity (inference mode); a
    # training path would need pltpu.prng_seed + prng_random_bits masking.
    return out[:M].reshape(*leading, n_out)


if __name__ == "__main__":
    key = jax.random.PRNGKey(0)
    k1, k2, k3, k4, k5 = jax.random.split(key, 5)

    # batch=2, seq=8, input_size=512, reduced_size=256 (module defaults)
    B, S, IN, RED = 2, 8, 512, 256
    x = jax.random.normal(k1, (B, S, IN), dtype=jnp.float32)
    w0 = jax.random.normal(k2, (RED, IN), dtype=jnp.float32) * 0.02
    b0 = jax.random.normal(k3, (RED,), dtype=jnp.float32) * 0.02
    w1 = jax.random.normal(k4, (RED, RED), dtype=jnp.float32) * 0.02
    b1 = jax.random.normal(k5, (RED,), dtype=jnp.float32) * 0.02

    ref1 = x @ w0.T + b0
    ref2 = jnp.maximum(ref1, 0.0) @ w1.T + b1

    # Default module config: n_ANNlayers=1 -> forward is just fc0(x).
    out1 = ann_forward(x, w0, b0, w1, b1, n_ANNlayers=1)
    jax.block_until_ready(out1)
    assert out1.shape == ref1.shape, (out1.shape, ref1.shape)
    assert jnp.allclose(out1, ref1, rtol=2e-3, atol=2e-3)

    # Repeated fc path, fully fused in one kernel (n_ANNlayers=2).
    out2 = ann_forward(x, w0, b0, w1, b1, n_ANNlayers=2)
    jax.block_until_ready(out2)
    assert out2.shape == ref2.shape, (out2.shape, ref2.shape)
    assert jnp.allclose(out2, ref2, rtol=2e-3, atol=2e-3)

    # bf16 MXU-input path (f32 accumulation) - looser tolerance.
    out3 = ann_forward(
        x, w0, b0, w1, b1, n_ANNlayers=2, compute_dtype=jnp.bfloat16
    )
    jax.block_until_ready(out3)
    assert out3.shape == ref2.shape, (out3.shape, ref2.shape)
    assert jnp.allclose(out3, ref2, rtol=3e-2, atol=3e-2)

    print("KERNEL_OK")
</pallas_src>

<mosaic_0001>
module attributes {stable_mosaic.version = 11 : i64} {
  func.func @_ann_fused_kernel(%arg0: i32, %arg1: memref<16x512xf32, #tpu.memory_space<vmem>>, %arg2: memref<256x512xf32, #tpu.memory_space<vmem>>, %arg3: memref<1x256xf32, #tpu.memory_space<vmem>>, %arg4: memref<16x256xf32, #tpu.memory_space<vmem>>) attributes {dimension_semantics = [#tpu.dimension_semantics<parallel>], iteration_bounds = array<i64: 1>, scalar_prefetch = 0 : i64, scratch_operands = 0 : i64, tpu.core_type = #tpu.core_type<tc>, window_params = [{transform_indices = @transform_0, window_bounds = array<i64: 16, 512>}, {pipeline_mode = #tpu.pipeline_mode<synchronous>, transform_indices = @transform_1, window_bounds = array<i64: 256, 512>}, {pipeline_mode = #tpu.pipeline_mode<synchronous>, transform_indices = @transform_2, window_bounds = array<i64: 1, 256>}, {transform_indices = @transform_3, window_bounds = array<i64: 16, 256>}]} {
    %c0 = arith.constant 0 : index
    %c0_0 = arith.constant 0 : index
    %0 = vector.load %arg1[%c0, %c0_0] : memref<16x512xf32, #tpu.memory_space<vmem>>, vector<16x512xf32>
    %c0_1 = arith.constant 0 : index
    %c0_2 = arith.constant 0 : index
    %1 = vector.load %arg2[%c0_1, %c0_2] : memref<256x512xf32, #tpu.memory_space<vmem>>, vector<256x512xf32>
    %cst = arith.constant dense<0.000000e+00> : vector<16x256xf32>
    %2 = tpu.matmul %0, %1, %cst {dimension_numbers = #tpu.dot_dimension_numbers<[1], [1], [0], [0], [0, 0, 1, 0], [], []>} : vector<16x512xf32>, vector<256x512xf32>, vector<16x256xf32> -> vector<16x256xf32>
    %c0_3 = arith.constant 0 : index
    %c0_4 = arith.constant 0 : index
    %3 = vector.load %arg3[%c0_3, %c0_4] : memref<1x256xf32, #tpu.memory_space<vmem>>, vector<1x256xf32>
    %4 = vector.broadcast %3 : vector<1x256xf32> to vector<16x256xf32>
    %5 = arith.addf %2, %4 : vector<16x256xf32>
    %c0_5 = arith.constant 0 : index
    %c0_6 = arith.constant 0 : index
    %6 = vector.load %arg4[%c0_5, %c0_6] : memref<16x256xf32, #tpu.memory_space<vmem>>, vector<16x256xf32>
    tpu.vector_store %arg4[%c0_5, %c0_6], %5 {strides = array<i32>} : memref<16x256xf32, #tpu.memory_space<vmem>>, vector<16x256xf32>,
    return
  }
  func.func @transform_0(%arg0: i32) -> (i32, i32) {
    %c0_i32 = arith.constant 0 : i32
    %c0_i32_0 = arith.constant 0 : i32
    return %arg0, %c0_i32 : i32, i32
  }
  func.func @transform_1(%arg0: i32) -> (i32, i32) {
    %c0_i32 = arith.constant 0 : i32
    %c0_i32_0 = arith.constant 0 : i32
    %c0_i32_1 = arith.constant 0 : i32
    return %c0_i32, %c0_i32_0 : i32, i32
  }
  func.func @transform_2(%arg0: i32) -> (i32, i32) {
    %c0_i32 = arith.constant 0 : i32
    %c0_i32_0 = arith.constant 0 : i32
    %c0_i32_1 = arith.constant 0 : i32
    return %c0_i32, %c0_i32_0 : i32, i32
  }
  func.func @transform_3(%arg0: i32) -> (i32, i32) {
    %c0_i32 = arith.constant 0 : i32
    %c0_i32_0 = arith.constant 0 : i32
    return %arg0, %c0_i32 : i32, i32
  }
}

</mosaic_0001>

<llo_original>
// kernel: ann_forward.1
$region0: #{ann_forward.1}
  #allocation0 [shape = 'u32[]', space=smem, size = 0x4, offset = 0x4, fixed_abs, tag = 'smem constant byte address 0x4 - core index']
  #allocation1 [shape = 'u32[144,128]{1,0:T(1,128)}', space=vmem, size = 0x12000, scoped, tag = 'internal scratch']
  %s0 = inlined_call_operand.hbm [shape: f32[16,512], index: 0, kind: input, shape index: {}]
  %s1 = inlined_call_operand.hbm [shape: f32[256,512], index: 1, kind: input, shape index: {}]
  %s2 = inlined_call_operand.vmem [shape: f32[1,256], index: 2, kind: input, shape index: {}]
  %s3 = inlined_call_operand.hbm [shape: f32[16,256], index: 3, kind: output, shape index: {}]
  %s4 = sld [smem:[#allocation0]]
  $region30: #{ann_forward.1} parent=0
    _
  %s6 = ssub.s32 1, %s4
  %s7 = scalar_select 0, %s6, %s4
  $region1: #{ann_forward.1} parent=0
    #allocation2 [shape = 'u8[32768]{0}', space=vmem, size = 0x8000, scoped, tag = 'input window, operand 0, single buffered']
    #allocation3 [shape = 's32[1]{0}', space=sflag, size = 0x4, scoped, tag = 'scoped memory for ann_forward.1']
    #allocation4 [shape = 's32[1]{0}', space=sflag, size = 0x4, scoped, tag = 'scoped memory for ann_forward.1']
    #allocation5 [shape = 'u8[524288]{0}', space=vmem, size = 0x80000, scoped, tag = 'input window, operand 1, single buffered']
    #allocation6 [shape = 's32[1]{0}', space=sflag, size = 0x4, scoped, tag = 'scoped memory for ann_forward.1']
    #allocation7 [shape = 'u8[16384]{0}', space=vmem, size = 0x4000, scoped, tag = 'output window, operand 0, single buffered']
    %8 = vsyncpa [#allocation3], 0
    %9 = vsyncpa [#allocation6], 0
    %10 = vsyncpa [#allocation4], 0
    // Predicated region
    $region2: #{ann_forward.1} parent=1 // pred_check
      _
    $region3: #{ann_forward.1} parent=1 // pred_check_branch
      %12 = sbr.rel (0) target = $region5
    $region4: #{ann_forward.1} parent=1 // pred_region
      %s14 = ssub.s32 1024, 1024
      %15 = vsyncadd [#allocation3], %s14
      %s16 = sshll.u32 [#allocation2], 4
      %s17 = int_to_ptr.vmem [resolvable:$true] %s16
      %22 = dma.hbm_to_vmem [thread:$0]  %s0, 1024, %s17, [#allocation3], 512, 512, 32
    $region5: #{ann_forward.1} parent=1 // pred_fallthru
      _
    // Predicated region
    $region6: #{ann_forward.1} parent=1 // pred_check
      _
    $region7: #{ann_forward.1} parent=1 // pred_check_branch
      %24 = sbr.rel (0) target = $region9
    $region8: #{ann_forward.1} parent=1 // pred_region
      %s26 = ssub.s32 16384, 16384
      %27 = vsyncadd [#allocation6], %s26
      %s28 = sshll.u32 [#allocation5], 4
      %s29 = int_to_ptr.vmem [resolvable:$true] %s28
      %34 = dma.hbm_to_vmem [thread:$0]  %s1, 16384, %s29, [#allocation6], 512, 512, 32
    $region9: #{ann_forward.1} parent=1 // pred_fallthru
      _
    // Predicated region
    $region10: #{ann_forward.1} parent=1 // pred_check
      _
    $region11: #{ann_forward.1} parent=1 // pred_check_branch
      %36 = sbr.rel (0) target = $region13
    $region12: #{ann_forward.1} parent=1 // pred_region
      _
    $region13: #{ann_forward.1} parent=1 // pred_fallthru
      _
    // Predicated region
    $region14: #{ann_forward.1} parent=1 // pred_check
      _
    $region15: #{ann_forward.1} parent=1 // pred_check_branch
      %38 = sbr.rel (0) target = $region17
    $region16: #{ann_forward.1} parent=1 // pred_region
      %39 = dma.done [#allocation3], 1024
    $region17: #{ann_forward.1} parent=1 // pred_fallthru
      _
    // Predicated region
    $region18: #{ann_forward.1} parent=1 // pred_check
      _
    $region19: #{ann_forward.1} parent=1 // pred_check_branch
      %41 = sbr.rel (0) target = $region21
    $region20: #{ann_forward.1} parent=1 // pred_region
      %42 = dma.done [#allocation6], 16384
    $region21: #{ann_forward.1} parent=1 // pred_fallthru
      _
    %v43 = vld [vmem:[#allocation2] sm:$0xff]
    %v44 = vld [vmem:[#allocation2 + $0x8] sm:$0xff]
    %v45 = vld [vmem:[#allocation2 + $0x10] sm:$0xff]
    %v46 = vld [vmem:[#allocation2 + $0x18] sm:$0xff]
    %v47 = vld [vmem:[#allocation2 + $0x20] sm:$0xff]
    %v48 = vld [vmem:[#allocation2 + $0x28] sm:$0xff]
    %v49 = vld [vmem:[#allocation2 + $0x30] sm:$0xff]
    %v50 = vld [vmem:[#allocation2 + $0x38] sm:$0xff]
    %v51 = vld [vmem:[#allocation5] sm:$0xff]
    %v52 = vld [vmem:[#allocation5 + $0x8] sm:$0xff]
    %v53 = vld [vmem:[#allocation5 + $0x10] sm:$0xff]
    %v54 = vld [vmem:[#allocation5 + $0x18] sm:$0xff]
    %v55 = vld [vmem:[#allocation5 + $0x20] sm:$0xff]
    %v56 = vld [vmem:[#allocation5 + $0x28] sm:$0xff]
    %v57 = vld [vmem:[#allocation5 + $0x30] sm:$0xff]
    %v58 = vld [vmem:[#allocation5 + $0x38] sm:$0xff]
    %v59 = vld [vmem:[#allocation5 + $0x40] sm:$0xff]
    %v60 = vld [vmem:[#allocation5 + $0x48] sm:$0xff]
    %v61 = vld [vmem:[#allocation5 + $0x50] sm:$0xff]
    %v62 = vld [vmem:[#allocation5 + $0x58] sm:$0xff]
    %v63 = vld [vmem:[#allocation5 + $0x60] sm:$0xff]
    %v64 = vld [vmem:[#allocation5 + $0x68] sm:$0xff]
    %v65 = vld [vmem:[#allocation5 + $0x70] sm:$0xff]
    %v66 = vld [vmem:[#allocation5 + $0x78] sm:$0xff]
    %v67 = vld [vmem:[#allocation5 + $0x80] sm:$0xff]
    %v68 = vld [vmem:[#allocation5 + $0x88] sm:$0xff]
    %v69 = vld [vmem:[#allocation5 + $0x90] sm:$0xff]
    %v70 = vld [vmem:[#allocation5 + $0x98] sm:$0xff]
    %v71 = vld [vmem:[#allocation5 + $0xa0] sm:$0xff]
    %v72 = vld [vmem:[#allocation5 + $0xa8] sm:$0xff]
    %v73 = vld [vmem:[#allocation5 + $0xb0] sm:$0xff]
    %v74 = vld [vmem:[#allocation5 + $0xb8] sm:$0xff]
    %v75 = vld [vmem:[#allocation5 + $0xc0] sm:$0xff]
    %v76 = vld [vmem:[#allocation5 + $0xc8] sm:$0xff]
    %v77 = vld [vmem:[#allocation5 + $0xd0] sm:$0xff]
    %v78 = vld [vmem:[#allocation5 + $0xd8] sm:$0xff]
    %v79 = vld [vmem:[#allocation5 + $0xe0] sm:$0xff]
    %v80 = vld [vmem:[#allocation5 + $0xe8] sm:$0xff]
    %v81 = vld [vmem:[#allocation5 + $0xf0] sm:$0xff]
    %v82 = vld [vmem:[#allocation5 + $0xf8] sm:$0xff]
    %v83 = vld [vmem:[#allocation5 + $0x100] sm:$0xff]
    %v84 = vld [vmem:[#allocation5 + $0x108] sm:$0xff]
    %v85 = vld [vmem:[#allocation5 + $0x110] sm:$0xff]
    %v86 = vld [vmem:[#allocation5 + $0x118] sm:$0xff]
    %v87 = vld [vmem:[#allocation5 + $0x120] sm:$0xff]
    %v88 = vld [vmem:[#allocation5 + $0x128] sm:$0xff]
    %v89 = vld [vmem:[#allocation5 + $0x130] sm:$0xff]
    %v90 = vld [vmem:[#allocation5 + $0x138] sm:$0xff]
    %v91 = vld [vmem:[#allocation5 + $0x140] sm:$0xff]
    %v92 = vld [vmem:[#allocation5 + $0x148] sm:$0xff]
    %v93 = vld [vmem:[#allocation5 + $0x150] sm:$0xff]
    %v94 = vld [vmem:[#allocation5 + $0x158] sm:$0xff]
    %v95 = vld [vmem:[#allocation5 + $0x160] sm:$0xff]
    %v96 = vld [vmem:[#allocation5 + $0x168] sm:$0xff]
    %v97 = vld [vmem:[#allocation5 + $0x170] sm:$0xff]
    %v98 = vld [vmem:[#allocation5 + $0x178] sm:$0xff]
    %v99 = vld [vmem:[#allocation5 + $0x180] sm:$0xff]
    %v100 = vld [vmem:[#allocation5 + $0x188] sm:$0xff]
    %v101 = vld [vmem:[#allocation5 + $0x190] sm:$0xff]
    %v102 = vld [vmem:[#allocation5 + $0x198] sm:$0xff]
    %v103 = vld [vmem:[#allocation5 + $0x1a0] sm:$0xff]
    %v104 = vld [vmem:[#allocation5 + $0x1a8] sm:$0xff]
    %v105 = vld [vmem:[#allocation5 + $0x1b0] sm:$0xff]
    %v106 = vld [vmem:[#allocation5 + $0x1b8] sm:$0xff]
    %v107 = vld [vmem:[#allocation5 + $0x1c0] sm:$0xff]
    %v108 = vld [vmem:[#allocation5 + $0x1c8] sm:$0xff]
    %v109 = vld [vmem:[#allocation5 + $0x1d0] sm:$0xff]
    %v110 = vld [vmem:[#allocation5 + $0x1d8] sm:$0xff]
    %v111 = vld [vmem:[#allocation5 + $0x1e0] sm:$0xff]
    %v112 = vld [vmem:[#allocation5 + $0x1e8] sm:$0xff]
    %v113 = vld [vmem:[#allocation5 + $0x1f0] sm:$0xff]
    %v114 = vld [vmem:[#allocation5 + $0x1f8] sm:$0xff]
    %v115 = vld [vmem:[#allocation5 + $0x200] sm:$0xff]
    %v116 = vld [vmem:[#allocation5 + $0x208] sm:$0xff]
    %v117 = vld [vmem:[#allocation5 + $0x210] sm:$0xff]
    %v118 = vld [vmem:[#allocation5 + $0x218] sm:$0xff]
    %v119 = vld [vmem:[#allocation5 + $0x220] sm:$0xff]
    %v120 = vld [vmem:[#allocation5 + $0x228] sm:$0xff]
    %v121 = vld [vmem:[#allocation5 + $0x230] sm:$0xff]
    %v122 = vld [vmem:[#allocation5 + $0x238] sm:$0xff]
    %v123 = vld [vmem:[#allocation5 + $0x240] sm:$0xff]
    %v124 = vld [vmem:[#allocation5 + $0x248] sm:$0xff]
    %v125 = vld [vmem:[#allocation5 + $0x250] sm:$0xff]
    %v126 = vld [vmem:[#allocation5 + $0x258] sm:$0xff]
    %v127 = vld [vmem:[#allocation5 + $0x260] sm:$0xff]
    %v128 = vld [vmem:[#allocation5 + $0x268] sm:$0xff]
    %v129 = vld [vmem:[#allocation5 + $0x270] sm:$0xff]
    %v130 = vld [vmem:[#allocation5 + $0x278] sm:$0xff]
    %v131 = vld [vmem:[#allocation5 + $0x280] sm:$0xff]
    %v132 = vld [vmem:[#allocation5 + $0x288] sm:$0xff]
    %v133 = vld [vmem:[#allocation5 + $0x290] sm:$0xff]
    %v134 = vld [vmem:[#allocation5 + $0x298] sm:$0xff]
    %v135 = vld [vmem:[#allocation5 + $0x2a0] sm:$0xff]
    %v136 = vld [vmem:[#allocation5 + $0x2a8] sm:$0xff]
    %v137 = vld [vmem:[#allocation5 + $0x2b0] sm:$0xff]
    %v138 = vld [vmem:[#allocation5 + $0x2b8] sm:$0xff]
    %v139 = vld [vmem:[#allocation5 + $0x2c0] sm:$0xff]
    %v140 = vld [vmem:[#allocation5 + $0x2c8] sm:$0xff]
    %v141 = vld [vmem:[#allocation5 + $0x2d0] sm:$0xff]
    %v142 = vld [vmem:[#allocation5 + $0x2d8] sm:$0xff]
    %v143 = vld [vmem:[#allocation5 + $0x2e0] sm:$0xff]
    %v144 = vld [vmem:[#allocation5 + $0x2e8] sm:$0xff]
    %v145 = vld [vmem:[#allocation5 + $0x2f0] sm:$0xff]
    %v146 = vld [vmem:[#allocation5 + $0x2f8] sm:$0xff]
    %v147 = vld [vmem:[#allocation5 + $0x300] sm:$0xff]
    %v148 = vld [vmem:[#allocation5 + $0x308] sm:$0xff]
    %v149 = vld [vmem:[#allocation5 + $0x310] sm:$0xff]
    %v150 = vld [vmem:[#allocation5 + $0x318] sm:$0xff]
    %v151 = vld [vmem:[#allocation5 + $0x320] sm:$0xff]
    %v152 = vld [vmem:[#allocation5 + $0x328] sm:$0xff]
    %v153 = vld [vmem:[#allocation5 + $0x330] sm:$0xff]
    %v154 = vld [vmem:[#allocation5 + $0x338] sm:$0xff]
    %v155 = vld [vmem:[#allocation5 + $0x340] sm:$0xff]
    %v156 = vld [vmem:[#allocation5 + $0x348] sm:$0xff]
    %v157 = vld [vmem:[#allocation5 + $0x350] sm:$0xff]
    %v158 = vld [vmem:[#allocation5 + $0x358] sm:$0xff]
    %v159 = vld [vmem:[#allocation5 + $0x360] sm:$0xff]
    %v160 = vld [vmem:[#allocation5 + $0x368] sm:$0xff]
    %v161 = vld [vmem:[#allocation5 + $0x370] sm:$0xff]
    %v162 = vld [vmem:[#allocation5 + $0x378] sm:$0xff]
    %v163 = vld [vmem:[#allocation5 + $0x380] sm:$0xff]
    %v164 = vld [vmem:[#allocation5 + $0x388] sm:$0xff]
    %v165 = vld [vmem:[#allocation5 + $0x390] sm:$0xff]
    %v166 = vld [vmem:[#allocation5 + $0x398] sm:$0xff]
    %v167 = vld [vmem:[#allocation5 + $0x3a0] sm:$0xff]
    %v168 = vld [vmem:[#allocation5 + $0x3a8] sm:$0xff]
    %v169 = vld [vmem:[#allocation5 + $0x3b0] sm:$0xff]
    %v170 = vld [vmem:[#allocation5 + $0x3b8] sm:$0xff]
    %v171 = vld [vmem:[#allocation5 + $0x3c0] sm:$0xff]
    %v172 = vld [vmem:[#allocation5 + $0x3c8] sm:$0xff]
    %v173 = vld [vmem:[#allocation5 + $0x3d0] sm:$0xff]
    %v174 = vld [vmem:[#allocation5 + $0x3d8] sm:$0xff]
    %v175 = vld [vmem:[#allocation5 + $0x3e0] sm:$0xff]
    %v176 = vld [vmem:[#allocation5 + $0x3e8] sm:$0xff]
    %v177 = vld [vmem:[#allocation5 + $0x3f0] sm:$0xff]
    %v178 = vld [vmem:[#allocation5 + $0x3f8] sm:$0xff]
    %v179 = vld [vmem:[%s2] sm:$0x3]
    %v181 = vlaneseq
    %v182 = vshrl.u32 %v181, 7
    %v183 = vsub.s32 0, %v182
    %v184 = vrot.slane %v179, %v183
    %v185 = vlaneseq
    %v186 = vshrl.u32 %v185, 7
    %v187 = vsub.s32 1, %v186
    %v188 = vrot.slane %v179, %v187
    %191 = vmatprep.subr.mxu0 %v112
    %192 = vmatpush1.xpose.msra.mxu0 %v111
    %193 = vmatprep.subr.mxu0 %v108
    %194 = vmatpush1.xpose.msra.mxu0 %v107
    %195 = vmatprep.subr.mxu0 %v104
    %196 = vmatpush1.xpose.msra.mxu0 %v103
    %197 = vmatprep.subr.mxu0 %v100
    %198 = vmatpush1.xpose.msra.mxu0 %v99
    %199 = vmatprep.subr.mxu0 %v96
    %200 = vmatpush1.xpose.msra.mxu0 %v95
    %201 = vmatprep.subr.mxu0 %v92
    %202 = vmatpush1.xpose.msra.mxu0 %v91
    %203 = vmatprep.subr.mxu0 %v88
    %204 = vmatpush1.xpose.msra.mxu0 %v87
    %205 = vmatprep.subr.mxu0 %v84
    %206 = vmatpush1.xpose.msra.mxu0 %v83
    %207 = vmatprep.subr.mxu0 %v80
    %208 = vmatpush1.xpose.msra.mxu0 %v79
    %209 = vmatprep.subr.mxu0 %v76
    %210 = vmatpush1.xpose.msra.mxu0 %v75
    %211 = vmatprep.subr.mxu0 %v72
    %212 = vmatpush1.xpose.msra.mxu0 %v71
    %213 = vmatprep.subr.mxu0 %v68
    %214 = vmatpush1.xpose.msra.mxu0 %v67
    %215 = vmatprep.subr.mxu0 %v64
    %216 = vmatpush1.xpose.msra.mxu0 %v63
    %217 = vmatprep.subr.mxu0 %v60
    %218 = vmatpush1.xpose.msra.mxu0 %v59
    %219 = vmatprep.subr.mxu0 %v56
    %220 = vmatpush1.xpose.msra.mxu0 %v55
    %221 = vmatprep.subr.mxu0 %v52
    %222 = vmatpush1.xpose.msra.mxu0 %v51
    %223 = vmatprep.subr.mxu0 %v176
    %224 = vmatpush2.xpose.msra.mxu0 %v175
    %225 = vmatprep.subr.mxu0 %v172
    %226 = vmatpush2.xpose.msra.mxu0 %v171
    %227 = vmatprep.subr.mxu0 %v168
    %228 = vmatpush2.xpose.msra.mxu0 %v167
    %229 = vmatprep.subr.mxu0 %v164
    %230 = vmatpush2.xpose.msra.mxu0 %v163
    %231 = vmatprep.subr.mxu0 %v160
    %232 = vmatpush2.xpose.msra.mxu0 %v159
    %233 = vmatprep.subr.mxu0 %v156
    %234 = vmatpush2.xpose.msra.mxu0 %v155
    %235 = vmatprep.subr.mxu0 %v152
    %236 = vmatpush2.xpose.msra.mxu0 %v151
    %237 = vmatprep.subr.mxu0 %v148
    %238 = vmatpush2.xpose.msra.mxu0 %v147
    %239 = vmatprep.subr.mxu0 %v144
    %240 = vmatpush2.xpose.msra.mxu0 %v143
    %241 = vmatprep.subr.mxu0 %v140
    %242 = vmatpush2.xpose.msra.mxu0 %v139
    %243 = vmatprep.subr.mxu0 %v136
    %244 = vmatpush2.xpose.msra.mxu0 %v135
    %245 = vmatprep.subr.mxu0 %v132
    %246 = vmatpush2.xpose.msra.mxu0 %v131
    %247 = vmatprep.subr.mxu0 %v128
    %248 = vmatpush2.xpose.msra.mxu0 %v127
    %249 = vmatprep.subr.mxu0 %v124
    %250 = vmatpush2.xpose.msra.mxu0 %v123
    %251 = vmatprep.subr.mxu0 %v120
    %252 = vmatpush2.xpose.msra.mxu0 %v119
    %253 = vmatprep.subr.mxu0 %v116
    %254 = vmatpush2.xpose.msra.mxu0 %v115
    %255 = vmatprep.mubr.f32.mxu0 %v44
    %256 = vmatmul.mubr.f32.gmra.mxu0 %v43
    %v257 = vpop.f32.mrf.mxu0
    %v258 = vadd.f32 %v184, %v257
    %v259 = vpop.f32.mrf.mxu0
    %v260 = vadd.f32 %v188, %v259
    %261 = vmatprep.mubr.f32.mxu0 %v48
    %262 = vmatmul.mubr.f32.gmra.mxu0 %v47
    %v263 = vpop.f32.mrf.mxu0
    %v264 = vadd.f32 %v184, %v263
    %v265 = vpop.f32.mrf.mxu0
    %v266 = vadd.f32 %v188, %v265
    %267 = vdwg.mxu0
    %268 = vmatprep.subr.mxu0 %v114
    %269 = vmatpush1.xpose.msra.mxu0 %v113
    %270 = vmatprep.subr.mxu0 %v110
    %271 = vmatpush1.xpose.msra.mxu0 %v109
    %272 = vmatprep.subr.mxu0 %v106
    %273 = vmatpush1.xpose.msra.mxu0 %v105
    %274 = vmatprep.subr.mxu0 %v102
    %275 = vmatpush1.xpose.msra.mxu0 %v101
    %276 = vmatprep.subr.mxu0 %v98
    %277 = vmatpush1.xpose.msra.mxu0 %v97
    %278 = vmatprep.subr.mxu0 %v94
    %279 = vmatpush1.xpose.msra.mxu0 %v93
    %280 = vmatprep.subr.mxu0 %v90
    %281 = vmatpush1.xpose.msra.mxu0 %v89
    %282 = vmatprep.subr.mxu0 %v86
    %283 = vmatpush1.xpose.msra.mxu0 %v85
    %284 = vmatprep.subr.mxu0 %v82
    %285 = vmatpush1.xpose.msra.mxu0 %v81
    %286 = vmatprep.subr.mxu0 %v78
    %287 = vmatpush1.xpose.msra.mxu0 %v77
    %288 = vmatprep.subr.mxu0 %v74
    %289 = vmatpush1.xpose.msra.mxu0 %v73
    %290 = vmatprep.subr.mxu0 %v70
    %291 = vmatpush1.xpose.msra.mxu0 %v69
    %292 = vmatprep.subr.mxu0 %v66
    %293 = vmatpush1.xpose.msra.mxu0 %v65
    %294 = vmatprep.subr.mxu0 %v62
    %295 = vmatpush1.xpose.msra.mxu0 %v61
    %296 = vmatprep.subr.mxu0 %v58
    %297 = vmatpush1.xpose.msra.mxu0 %v57
    %298 = vmatprep.subr.mxu0 %v54
    %299 = vmatpush1.xpose.msra.mxu0 %v53
    %300 = vmatprep.subr.mxu0 %v178
    %301 = vmatpush2.xpose.msra.mxu0 %v177
    %302 = vmatprep.subr.mxu0 %v174
    %303 = vmatpush2.xpose.msra.mxu0 %v173
    %304 = vmatprep.subr.mxu0 %v170
    %305 = vmatpush2.xpose.msra.mxu0 %v169
    %306 = vmatprep.subr.mxu0 %v166
    %307 = vmatpush2.xpose.msra.mxu0 %v165
    %308 = vmatprep.subr.mxu0 %v162
    %309 = vmatpush2.xpose.msra.mxu0 %v161
    %310 = vmatprep.subr.mxu0 %v158
    %311 = vmatpush2.xpose.msra.mxu0 %v157
    %312 = vmatprep.subr.mxu0 %v154
    %313 = vmatpush2.xpose.msra.mxu0 %v153
    %314 = vmatprep.subr.mxu0 %v150
    %315 = vmatpush2.xpose.msra.mxu0 %v149
    %316 = vmatprep.subr.mxu0 %v146
    %317 = vmatpush2.xpose.msra.mxu0 %v145
    %318 = vmatprep.subr.mxu0 %v142
    %319 = vmatpush2.xpose.msra.mxu0 %v141
    %320 = vmatprep.subr.mxu0 %v138
    %321 = vmatpush2.xpose.msra.mxu0 %v137
    %322 = vmatprep.subr.mxu0 %v134
    %323 = vmatpush2.xpose.msra.mxu0 %v133
    %324 = vmatprep.subr.mxu0 %v130
    %325 = vmatpush2.xpose.msra.mxu0 %v129
    %326 = vmatprep.subr.mxu0 %v126
    %327 = vmatpush2.xpose.msra.mxu0 %v125
    %328 = vmatprep.subr.mxu0 %v122
    %329 = vmatpush2.xpose.msra.mxu0 %v121
    %330 = vmatprep.subr.mxu0 %v118
    %331 = vmatpush2.xpose.msra.mxu0 %v117
    %332 = vmatprep.mubr.f32.mxu0 %v46
    %333 = vmatmul.mubr.f32.gmra.mxu0 %v45
    %v334 = vpop.f32.mrf.mxu0
    %v335 = vadd.f32 %v258, %v334
    %v336 = vpop.f32.mrf.mxu0
    %v337 = vadd.f32 %v260, %v336
    %338 = vmatprep.mubr.f32.mxu0 %v50
    %339 = vmatmul.mubr.f32.gmra.mxu0 %v49
    %v340 = vpop.f32.mrf.mxu0
    %v341 = vadd.f32 %v264, %v340
    %v342 = vpop.f32.mrf.mxu0
    %v343 = vadd.f32 %v266, %v342
    %344 = vdwg.mxu0
    %345 = vst [vmem:[#allocation7] sm:$0xff] %v335
    %346 = vst [vmem:[#allocation7 + $0x8] sm:$0xff] %v337
    %347 = vst [vmem:[#allocation7 + $0x10] sm:$0xff] %v341
    %348 = vst [vmem:[#allocation7 + $0x18] sm:$0xff] %v343
    // Predicated region
    $region22: #{ann_forward.1} parent=1 // pred_check
      _
    $region23: #{ann_forward.1} parent=1 // pred_check_branch
      %350 = sbr.rel (0) target = $region25
    $region24: #{ann_forward.1} parent=1 // pred_region
      %s352 = ssub.s32 512, 512
      %353 = vsyncadd [#allocation4], %s352
      %s354 = sshll.u32 [#allocation7], 4
      %s355 = int_to_ptr.vmem [resolvable:$true] %s354
      %360 = dma.vmem_to_hbm [thread:$0]  %s355, 512, %s3, [#allocation4], 256, 256, 16
    $region25: #{ann_forward.1} parent=1 // pred_fallthru
      _
    // Predicated region
    $region26: #{ann_forward.1} parent=1 // pred_check
      _
    $region27: #{ann_forward.1} parent=1 // pred_check_branch
      %362 = sbr.rel (0) target = $region29
    $region28: #{ann_forward.1} parent=1 // pred_region
      %363 = dma.done [#allocation4], 512
    $region29: #{ann_forward.1} parent=1 // pred_fallthru
      _
    %364 = vsyncpa [#allocation3], 1
    %365 = vsyncpa [#allocation6], 1
    %366 = vsyncpa [#allocation4], 1

</llo_original>
